<compile_context>
chip_gen: v6e
topology: v6e:2x2x1
jax: 0.10.0
libtpu: 0.0.40
codegen_flags: <defaults>
</compile_context>

<pallas_src>
import jax
import jax.numpy as jnp
from jax.experimental import pallas as pl
from jax.experimental.pallas import tpu as pltpu


def _round_up(x: int, m: int) -> int:
    return (x + m - 1) // m * m


def _vmem_cap_bytes() -> int:
    """~85% of physical VMEM of the current generation; conservative fallback."""
    try:
        return int(0.85 * pltpu.get_tpu_info().vmem_capacity_bytes)
    except Exception:
        return 64 * 1024 * 1024  # fits every generation (v7x has 64 MiB per TC)


def _pick_batch_tile(B: int):
    """Pick (TB, B_padded): prefer >=2 grid steps (v7x megacore), then minimal
    row padding, then the larger tile."""
    best_tb, best_bp, best_key = None, None, None
    for tb in (512, 384, 256, 128):
        bp = _round_up(max(B, 1), tb)
        key = (bp // tb < 2, bp - B, -tb)
        if best_key is None or key < best_key:
            best_tb, best_bp, best_key = tb, bp, key
    return best_tb, best_bp


def mlp_relu_kernel(x_ref, w1_ref, b1_ref, w2_ref, b2_ref, o_ref):
    # Layer 1: (TB, D_in) @ (D_in, H); x cast to the MXU dtype in-kernel.
    x = x_ref[...].astype(w1_ref.dtype)
    h = jnp.dot(x, w1_ref[...], preferred_element_type=jnp.float32)
    h = jnp.maximum(h + b1_ref[...], 0.0)            # f32 bias add + ReLU on the VPU
    # Layer 2: (TB, H) @ (H, D_out); keep f32 accumulation.
    y = jnp.dot(h.astype(w2_ref.dtype), w2_ref[...], preferred_element_type=jnp.float32)
    o_ref[...] = (y + b2_ref[...]).astype(o_ref.dtype)


_HAS_BUFFERED = hasattr(pl, "Buffered")


class NetReluPallas:
    """Fused NetRelu forward with one-time weight preparation.

    Construct with PyTorch-layout params: w1 (H, D_in), b1 (H,), w2 (D_out, H),
    b2 (D_out,). __call__(x) takes (B, D_in) f32 and returns (B, D_out).
    """

    def __init__(self, w1, b1, w2, b2, *,
                 compute_dtype=jnp.bfloat16, out_dtype=jnp.float32):
        H, D_in = w1.shape
        D_out = w2.shape[0]
        self.D_in, self.H, self.D_out = D_in, H, D_out
        self.compute_dtype = jnp.dtype(compute_dtype)
        self.out_dtype = jnp.dtype(out_dtype)

        # TODO(synk): on v6e/v7x, padding 128-wide dims up to 256 would fill the
        # 256x256 MXU better for mid-sized layers; kept at 128 here (v5e-safe).
        self.D_in_p = _round_up(D_in, 128)
        self.H_p = _round_up(H, 128)
        self.D_out_p = _round_up(D_out, 128)

        def pad2(a, r, c):
            a = jnp.asarray(a, jnp.float32)
            return jnp.pad(a, ((0, r - a.shape[0]), (0, c - a.shape[1])))

        # One-time: pad, pre-transpose to NN layout, cast to the MXU dtype.
        self.w1_p = pad2(w1, self.H_p, self.D_in_p).T.astype(self.compute_dtype)   # (D_in_p, H_p)
        self.w2_p = pad2(w2, self.D_out_p, self.H_p).T.astype(self.compute_dtype)  # (H_p, D_out_p)
        self.b1_p = jnp.pad(jnp.asarray(b1, jnp.float32), (0, self.H_p - H))[None, :]
        self.b2_p = jnp.pad(jnp.asarray(b2, jnp.float32), (0, self.D_out_p - D_out))[None, :]
        self.w1_p, self.w2_p, self.b1_p, self.b2_p = jax.block_until_ready(
            (self.w1_p, self.w2_p, self.b1_p, self.b2_p))

    def _vmem_limit(self, TB: int) -> int:
        cb = self.compute_dtype.itemsize
        ob = self.out_dtype.itemsize
        need = (
            2 * TB * self.D_in_p * 4                                   # f32 x tiles, 2-buffered
            + 2 * TB * self.D_out_p * ob                               # output tiles, 2-buffered
            + (self.D_in_p * self.H_p + self.H_p * self.D_out_p) * cb  # single-buffered weights
            + (self.H_p + self.D_out_p) * 4                            # biases (f32)
            + TB * self.D_in_p * cb                                    # in-kernel bf16 copy of x
            + TB * self.H_p * (4 + cb)                                 # f32 hidden + bf16 recast
            + TB * self.D_out_p * 4                                    # f32 pre-cast output
        )
        cap = _vmem_cap_bytes()
        return int(min(max(int(1.5 * need), 32 * 1024 * 1024), cap))

    def _call_pallas(self, x_p, TB, grid, vmem_limit, single_buffer_weights):
        resident = (dict(pipeline_mode=pl.Buffered(1))
                    if (single_buffer_weights and _HAS_BUFFERED) else {})
        return pl.pallas_call(
            mlp_relu_kernel,
            out_shape=jax.ShapeDtypeStruct((x_p.shape[0], self.D_out_p), self.out_dtype),
            grid=grid,
            in_specs=[
                pl.BlockSpec((TB, self.D_in_p), lambda i: (i, 0)),                    # x: pipelined
                pl.BlockSpec((self.D_in_p, self.H_p), lambda i: (0, 0), **resident),  # W1: resident
                pl.BlockSpec((1, self.H_p), lambda i: (0, 0), **resident),            # b1: resident
                pl.BlockSpec((self.H_p, self.D_out_p), lambda i: (0, 0), **resident), # W2: resident
                pl.BlockSpec((1, self.D_out_p), lambda i: (0, 0), **resident),        # b2: resident
            ],
            out_specs=pl.BlockSpec((TB, self.D_out_p), lambda i: (i, 0)),
            compiler_params=pltpu.CompilerParams(
                dimension_semantics=("parallel",),
                vmem_limit_bytes=vmem_limit,
            ),
        )(x_p, self.w1_p, self.b1_p, self.w2_p, self.b2_p)

    def __call__(self, x):
        B, D_in = x.shape
        assert D_in == self.D_in, "feature-dim mismatch"
        TB, B_p = _pick_batch_tile(B)
        grid = (B_p // TB,)
        # Per-call work on x only: zero-pad rows/features, keep f32 (cast in-kernel).
        x_p = jnp.pad(jnp.asarray(x, jnp.float32),
                      ((0, B_p - B), (0, self.D_in_p - D_in)))
        vmem_limit = self._vmem_limit(TB)
        # TODO(synk): if resident weights + tiles ever exceed the v7x VMEM cap,
        # add a K-split grid axis ("arbitrary", last) with an f32 VMEM accumulator
        # (pl.when init/finalize) instead of shrinking TB.
        try:
            out_p = self._call_pallas(x_p, TB, grid, vmem_limit,
                                      single_buffer_weights=True)
        except Exception:
            # Fallback for jax builds without BlockSpec(pipeline_mode=...).
            out_p = self._call_pallas(x_p, TB, grid, vmem_limit,
                                      single_buffer_weights=False)
        return out_p[:B, :self.D_out]


if __name__ == "__main__":
    # Small shapes consistent with NetRelu(D_in, H, D_out).
    B, D_in, H, D_out = 8, 32, 64, 16

    key = jax.random.PRNGKey(0)
    kx, kw1, kb1, kw2, kb2 = jax.random.split(key, 5)

    # PyTorch-style init: uniform(-1/sqrt(fan_in), 1/sqrt(fan_in)).
    s1 = 1.0 / jnp.sqrt(D_in)
    s2 = 1.0 / jnp.sqrt(H)
    x = jax.random.normal(kx, (B, D_in), dtype=jnp.float32)
    w1 = jax.random.uniform(kw1, (H, D_in), minval=-s1, maxval=s1, dtype=jnp.float32)
    b1 = jax.random.uniform(kb1, (H,), minval=-s1, maxval=s1, dtype=jnp.float32)
    w2 = jax.random.uniform(kw2, (D_out, H), minval=-s2, maxval=s2, dtype=jnp.float32)
    b2 = jax.random.uniform(kb2, (D_out,), minval=-s2, maxval=s2, dtype=jnp.float32)

    net = NetReluPallas(w1, b1, w2, b2)          # one-time weight prep
    out = jax.block_until_ready(net(x))
    assert out.shape == (B, D_out)

    # Tight check vs. a reference that applies the same bf16 input quantization
    # (MXU does exact bf16 products with f32 accumulation).
    q = lambda a: a.astype(jnp.bfloat16).astype(jnp.float32)
    h_ref = jnp.maximum(q(x) @ q(w1).T + b1, 0.0)
    ref_bf16 = q(h_ref) @ q(w2).T + b2
    assert jnp.allclose(out, ref_bf16, atol=1e-4, rtol=1e-4)

    # Loose sanity check vs. the pure-f32 PyTorch-equivalent forward.
    ref_f32 = jnp.maximum(x @ w1.T + b1, 0.0) @ w2.T + b2
    assert jnp.allclose(out, ref_f32, atol=5e-2, rtol=5e-2)

    print("KERNEL_OK")
</pallas_src>

<mosaic_0001>
module attributes {stable_mosaic.version = 11 : i64} {
  func.func @mlp_relu_kernel(%arg0: i32, %arg1: memref<128x128xf32, #tpu.memory_space<vmem>>, %arg2: memref<128x128xbf16, #tpu.memory_space<vmem>>, %arg3: memref<1x128xf32, #tpu.memory_space<vmem>>, %arg4: memref<128x128xbf16, #tpu.memory_space<vmem>>, %arg5: memref<1x128xf32, #tpu.memory_space<vmem>>, %arg6: memref<128x128xf32, #tpu.memory_space<vmem>>) attributes {dimension_semantics = [#tpu.dimension_semantics<parallel>], iteration_bounds = array<i64: 1>, scalar_prefetch = 0 : i64, scratch_operands = 0 : i64, tpu.core_type = #tpu.core_type<tc>, window_params = [{transform_indices = @transform_0, window_bounds = array<i64: 128, 128>}, {pipeline_mode = #tpu.pipeline_mode<synchronous>, transform_indices = @transform_1, window_bounds = array<i64: 128, 128>}, {pipeline_mode = #tpu.pipeline_mode<synchronous>, transform_indices = @transform_2, window_bounds = array<i64: 1, 128>}, {pipeline_mode = #tpu.pipeline_mode<synchronous>, transform_indices = @transform_3, window_bounds = array<i64: 128, 128>}, {pipeline_mode = #tpu.pipeline_mode<synchronous>, transform_indices = @transform_4, window_bounds = array<i64: 1, 128>}, {transform_indices = @transform_5, window_bounds = array<i64: 128, 128>}]} {
    %c0 = arith.constant 0 : index
    %c0_0 = arith.constant 0 : index
    %0 = vector.load %arg1[%c0, %c0_0] : memref<128x128xf32, #tpu.memory_space<vmem>>, vector<128x128xf32>
    %1 = arith.truncf %0 : vector<128x128xf32> to vector<128x128xbf16>
    %c0_1 = arith.constant 0 : index
    %c0_2 = arith.constant 0 : index
    %2 = vector.load %arg2[%c0_1, %c0_2] : memref<128x128xbf16, #tpu.memory_space<vmem>>, vector<128x128xbf16>
    %cst = arith.constant dense<0.000000e+00> : vector<128x128xf32>
    %3 = tpu.matmul %1, %2, %cst {dimension_numbers = #tpu.dot_dimension_numbers<[1], [0], [0], [1], [0, 0, 1, 1], [], []>} : vector<128x128xbf16>, vector<128x128xbf16>, vector<128x128xf32> -> vector<128x128xf32>
    %c0_3 = arith.constant 0 : index
    %c0_4 = arith.constant 0 : index
    %4 = vector.load %arg3[%c0_3, %c0_4] : memref<1x128xf32, #tpu.memory_space<vmem>>, vector<1x128xf32>
    %5 = vector.broadcast %4 : vector<1x128xf32> to vector<128x128xf32>
    %6 = arith.addf %3, %5 : vector<128x128xf32>
    %cst_5 = arith.constant 0.000000e+00 : f32
    %7 = vector.broadcast %cst_5 : f32 to vector<128x128xf32>
    %8 = arith.maximumf %6, %7 : vector<128x128xf32>
    %9 = arith.truncf %8 : vector<128x128xf32> to vector<128x128xbf16>
    %c0_6 = arith.constant 0 : index
    %c0_7 = arith.constant 0 : index
    %10 = vector.load %arg4[%c0_6, %c0_7] : memref<128x128xbf16, #tpu.memory_space<vmem>>, vector<128x128xbf16>
    %cst_8 = arith.constant dense<0.000000e+00> : vector<128x128xf32>
    %11 = tpu.matmul %9, %10, %cst_8 {dimension_numbers = #tpu.dot_dimension_numbers<[1], [0], [0], [1], [0, 0, 1, 1], [], []>} : vector<128x128xbf16>, vector<128x128xbf16>, vector<128x128xf32> -> vector<128x128xf32>
    %c0_9 = arith.constant 0 : index
    %c0_10 = arith.constant 0 : index
    %12 = vector.load %arg5[%c0_9, %c0_10] : memref<1x128xf32, #tpu.memory_space<vmem>>, vector<1x128xf32>
    %13 = vector.broadcast %12 : vector<1x128xf32> to vector<128x128xf32>
    %14 = arith.addf %11, %13 : vector<128x128xf32>
    %c0_11 = arith.constant 0 : index
    %c0_12 = arith.constant 0 : index
    %15 = vector.load %arg6[%c0_11, %c0_12] : memref<128x128xf32, #tpu.memory_space<vmem>>, vector<128x128xf32>
    tpu.vector_store %arg6[%c0_11, %c0_12], %14 {strides = array<i32>} : memref<128x128xf32, #tpu.memory_space<vmem>>, vector<128x128xf32>,
    return
  }
  func.func @transform_0(%arg0: i32) -> (i32, i32) {
    %c0_i32 = arith.constant 0 : i32
    %c0_i32_0 = arith.constant 0 : i32
    return %arg0, %c0_i32 : i32, i32
  }
  func.func @transform_1(%arg0: i32) -> (i32, i32) {
    %c0_i32 = arith.constant 0 : i32
    %c0_i32_0 = arith.constant 0 : i32
    %c0_i32_1 = arith.constant 0 : i32
    return %c0_i32, %c0_i32_0 : i32, i32
  }
  func.func @transform_2(%arg0: i32) -> (i32, i32) {
    %c0_i32 = arith.constant 0 : i32
    %c0_i32_0 = arith.constant 0 : i32
    %c0_i32_1 = arith.constant 0 : i32
    return %c0_i32, %c0_i32_0 : i32, i32
  }
  func.func @transform_3(%arg0: i32) -> (i32, i32) {
    %c0_i32 = arith.constant 0 : i32
    %c0_i32_0 = arith.constant 0 : i32
    %c0_i32_1 = arith.constant 0 : i32
    return %c0_i32, %c0_i32_0 : i32, i32
  }
  func.func @transform_4(%arg0: i32) -> (i32, i32) {
    %c0_i32 = arith.constant 0 : i32
    %c0_i32_0 = arith.constant 0 : i32
    %c0_i32_1 = arith.constant 0 : i32
    return %c0_i32, %c0_i32_0 : i32, i32
  }
  func.func @transform_5(%arg0: i32) -> (i32, i32) {
    %c0_i32 = arith.constant 0 : i32
    %c0_i32_0 = arith.constant 0 : i32
    return %arg0, %c0_i32 : i32, i32
  }
}

module attributes {stable_mosaic.version = 11 : i64} {
  func.func @mlp_relu_kernel(%arg0: i32, %arg1: memref<128x128xf32, #tpu.memory_space<vmem>>, %arg2: memref<128x128xbf16, #tpu.memory_space<vmem>>, %arg3: memref<1x128xf32, #tpu.memory_space<vmem>>, %arg4: memref<128x128xbf16, #tpu.memory_space<vmem>>, %arg5: memref<1x128xf32, #tpu.memory_space<vmem>>, %arg6: memref<128x128xf32, #tpu.memory_space<vmem>>) attributes {dimension_semantics = [#tpu.dimension_semantics<parallel>], iteration_bounds = array<i64: 1>, scalar_prefetch = 0 : i64, scratch_operands = 0 : i64, tpu.core_type = #tpu.core_type<tc>, window_params = [{transform_indices = @transform_0, window_bounds = array<i64: 128, 128>}, {pipeline_mode = #tpu.pipeline_mode<synchronous>, transform_indices = @transform_1, window_bounds = array<i64: 128, 128>}, {pipeline_mode = #tpu.pipeline_mode<synchronous>, transform_indices = @transform_2, window_bounds = array<i64: 1, 128>}, {pipeline_mode = #tpu.pipeline_mode<synchronous>, transform_indices = @transform_3, window_bounds = array<i64: 128, 128>}, {pipeline_mode = #tpu.pipeline_mode<synchronous>, transform_indices = @transform_4, window_bounds = array<i64: 1, 128>}, {transform_indices = @transform_5, window_bounds = array<i64: 128, 128>}]} {
    %c0 = arith.constant 0 : index
    %c0_0 = arith.constant 0 : index
    %0 = vector.load %arg1[%c0, %c0_0] : memref<128x128xf32, #tpu.memory_space<vmem>>, vector<128x128xf32>
    %1 = arith.truncf %0 : vector<128x128xf32> to vector<128x128xbf16>
    %c0_1 = arith.constant 0 : index
    %c0_2 = arith.constant 0 : index
    %2 = vector.load %arg2[%c0_1, %c0_2] : memref<128x128xbf16, #tpu.memory_space<vmem>>, vector<128x128xbf16>
    %cst = arith.constant dense<0.000000e+00> : vector<128x128xf32>
    %3 = tpu.matmul %1, %2, %cst {dimension_numbers = #tpu.dot_dimension_numbers<[1], [0], [0], [1], [0, 0, 1, 1], [], []>} : vector<128x128xbf16>, vector<128x128xbf16>, vector<128x128xf32> -> vector<128x128xf32>
    %c0_3 = arith.constant 0 : index
    %c0_4 = arith.constant 0 : index
    %4 = vector.load %arg3[%c0_3, %c0_4] : memref<1x128xf32, #tpu.memory_space<vmem>>, vector<1x128xf32>
    %5 = vector.broadcast %4 : vector<1x128xf32> to vector<128x128xf32>
    %6 = arith.addf %3, %5 : vector<128x128xf32>
    %cst_5 = arith.constant 0.000000e+00 : f32
    %7 = vector.broadcast %cst_5 : f32 to vector<128x128xf32>
    %8 = arith.maximumf %6, %7 : vector<128x128xf32>
    %9 = arith.truncf %8 : vector<128x128xf32> to vector<128x128xbf16>
    %c0_6 = arith.constant 0 : index
    %c0_7 = arith.constant 0 : index
    %10 = vector.load %arg4[%c0_6, %c0_7] : memref<128x128xbf16, #tpu.memory_space<vmem>>, vector<128x128xbf16>
    %cst_8 = arith.constant dense<0.000000e+00> : vector<128x128xf32>
    %11 = tpu.matmul %9, %10, %cst_8 {dimension_numbers = #tpu.dot_dimension_numbers<[1], [0], [0], [1], [0, 0, 1, 1], [], []>} : vector<128x128xbf16>, vector<128x128xbf16>, vector<128x128xf32> -> vector<128x128xf32>
    %c0_9 = arith.constant 0 : index
    %c0_10 = arith.constant 0 : index
    %12 = vector.load %arg5[%c0_9, %c0_10] : memref<1x128xf32, #tpu.memory_space<vmem>>, vector<1x128xf32>
    %13 = vector.broadcast %12 : vector<1x128xf32> to vector<128x128xf32>
    %14 = arith.addf %11, %13 : vector<128x128xf32>
    %c0_11 = arith.constant 0 : index
    %c0_12 = arith.constant 0 : index
    %15 = vector.load %arg6[%c0_11, %c0_12] : memref<128x128xf32, #tpu.memory_space<vmem>>, vector<128x128xf32>
    tpu.vector_store %arg6[%c0_11, %c0_12], %14 {strides = array<i32>} : memref<128x128xf32, #tpu.memory_space<vmem>>, vector<128x128xf32>,
    return
  }
  func.func @transform_0(%arg0: i32) -> (i32, i32) {
    %c0_i32 = arith.constant 0 : i32
    %c0_i32_0 = arith.constant 0 : i32
    return %arg0, %c0_i32 : i32, i32
  }
  func.func @transform_1(%arg0: i32) -> (i32, i32) {
    %c0_i32 = arith.constant 0 : i32
    %c0_i32_0 = arith.constant 0 : i32
    %c0_i32_1 = arith.constant 0 : i32
    return %c0_i32, %c0_i32_0 : i32, i32
  }
  func.func @transform_2(%arg0: i32) -> (i32, i32) {
    %c0_i32 = arith.constant 0 : i32
    %c0_i32_0 = arith.constant 0 : i32
    %c0_i32_1 = arith.constant 0 : i32
    return %c0_i32, %c0_i32_0 : i32, i32
  }
  func.func @transform_3(%arg0: i32) -> (i32, i32) {
    %c0_i32 = arith.constant 0 : i32
    %c0_i32_0 = arith.constant 0 : i32
    %c0_i32_1 = arith.constant 0 : i32
    return %c0_i32, %c0_i32_0 : i32, i32
  }
  func.func @transform_4(%arg0: i32) -> (i32, i32) {
    %c0_i32 = arith.constant 0 : i32
    %c0_i32_0 = arith.constant 0 : i32
    %c0_i32_1 = arith.constant 0 : i32
    return %c0_i32, %c0_i32_0 : i32, i32
  }
  func.func @transform_5(%arg0: i32) -> (i32, i32) {
    %c0_i32 = arith.constant 0 : i32
    %c0_i32_0 = arith.constant 0 : i32
    return %arg0, %c0_i32 : i32, i32
  }
}

</mosaic_0001>

<llo_original>
// kernel: tpu_custom_call.1
$region0: #{tpu_custom_call.1}
  #allocation0 [shape = 'u32[]', space=smem, size = 0x4, offset = 0x4, fixed_abs, tag = 'smem constant byte address 0x4 - core index']
  #allocation1 [shape = 'u32[144,128]{1,0:T(1,128)}', space=vmem, size = 0x12000, scoped, tag = 'internal scratch']
  %s0 = inlined_call_operand.hbm [shape: f32[128,128], index: 0, kind: input, shape index: {}]
  %s1 = inlined_call_operand.hbm [shape: bf16[128,128], index: 1, kind: input, shape index: {}]
  %s2 = inlined_call_operand.vmem [shape: f32[1,128], index: 2, kind: input, shape index: {}]
  %s3 = inlined_call_operand.hbm [shape: bf16[128,128], index: 3, kind: input, shape index: {}]
  %s4 = inlined_call_operand.vmem [shape: f32[1,128], index: 4, kind: input, shape index: {}]
  %s5 = inlined_call_operand.hbm [shape: f32[128,128], index: 5, kind: output, shape index: {}]
  %s6 = sld [smem:[#allocation0]]
  $region42: #{tpu_custom_call.1} parent=0
    _
  %s8 = ssub.s32 1, %s6
  %s9 = scalar_select 0, %s8, %s6
  $region1: #{tpu_custom_call.1} parent=0
    #allocation2 [shape = 'u8[65536]{0}', space=vmem, size = 0x10000, scoped, tag = 'input window, operand 0, single buffered']
    #allocation3 [shape = 's32[1]{0}', space=sflag, size = 0x4, scoped, tag = 'scoped memory for tpu_custom_call.1']
    #allocation4 [shape = 's32[1]{0}', space=sflag, size = 0x4, scoped, tag = 'scoped memory for tpu_custom_call.1']
    #allocation5 [shape = 'u8[32768]{0}', space=vmem, size = 0x8000, scoped, tag = 'input window, operand 1, single buffered']
    #allocation6 [shape = 's32[1]{0}', space=sflag, size = 0x4, scoped, tag = 'scoped memory for tpu_custom_call.1']
    #allocation7 [shape = 'u8[32768]{0}', space=vmem, size = 0x8000, scoped, tag = 'input window, operand 3, single buffered']
    #allocation8 [shape = 'u8[65536]{0}', space=vmem, size = 0x10000, scoped, tag = 'output window, operand 0, single buffered']
    %10 = vsyncpa [#allocation3], 0
    %11 = vsyncpa [#allocation6], 0
    %12 = vsyncpa [#allocation4], 0
    // Predicated region
    $region2: #{tpu_custom_call.1} parent=1 // pred_check
      _
    $region3: #{tpu_custom_call.1} parent=1 // pred_check_branch
      %14 = sbr.rel (0) target = $region5
    $region4: #{tpu_custom_call.1} parent=1 // pred_region
      %s16 = ssub.s32 2048, 2048
      %17 = vsyncadd [#allocation3], %s16
      %s18 = sshll.u32 [#allocation2], 4
      %s19 = int_to_ptr.vmem [resolvable:$true] %s18
      %24 = dma.hbm_to_vmem [thread:$0]  %s0, 2048, %s19, [#allocation3], 128, 128, 8
    $region5: #{tpu_custom_call.1} parent=1 // pred_fallthru
      _
    // Predicated region
    $region6: #{tpu_custom_call.1} parent=1 // pred_check
      _
    $region7: #{tpu_custom_call.1} parent=1 // pred_check_branch
      %26 = sbr.rel (0) target = $region9
    $region8: #{tpu_custom_call.1} parent=1 // pred_region
      %s28 = ssub.s32 1024, 1024
      %29 = vsyncadd [#allocation6], %s28
      %s30 = sshll.u32 [#allocation5], 4
      %s31 = int_to_ptr.vmem [resolvable:$true] %s30
      %36 = dma.hbm_to_vmem [thread:$0]  %s1, 1024, %s31, [#allocation6], 64, 64, 4
    $region9: #{tpu_custom_call.1} parent=1 // pred_fallthru
      _
    // Predicated region
    $region10: #{tpu_custom_call.1} parent=1 // pred_check
      _
    $region11: #{tpu_custom_call.1} parent=1 // pred_check_branch
      %38 = sbr.rel (0) target = $region13
    $region12: #{tpu_custom_call.1} parent=1 // pred_region
      _
    $region13: #{tpu_custom_call.1} parent=1 // pred_fallthru
      _
    // Predicated region
    $region14: #{tpu_custom_call.1} parent=1 // pred_check
      _
    $region15: #{tpu_custom_call.1} parent=1 // pred_check_branch
      %40 = sbr.rel (0) target = $region17
    $region16: #{tpu_custom_call.1} parent=1 // pred_region
      %s42 = ssub.s32 1024, 1024
      %43 = vsyncadd [#allocation6], %s42
      %s44 = sshll.u32 [#allocation7], 4
      %s45 = int_to_ptr.vmem [resolvable:$true] %s44
      %50 = dma.hbm_to_vmem [thread:$0]  %s3, 1024, %s45, [#allocation6], 64, 64, 4
    $region17: #{tpu_custom_call.1} parent=1 // pred_fallthru
      _
    // Predicated region
    $region18: #{tpu_custom_call.1} parent=1 // pred_check
      _
    $region19: #{tpu_custom_call.1} parent=1 // pred_check_branch
      %52 = sbr.rel (0) target = $region21
    $region20: #{tpu_custom_call.1} parent=1 // pred_region
      _
    $region21: #{tpu_custom_call.1} parent=1 // pred_fallthru
      _
    // Predicated region
    $region22: #{tpu_custom_call.1} parent=1 // pred_check
      _
    $region23: #{tpu_custom_call.1} parent=1 // pred_check_branch
      %54 = sbr.rel (0) target = $region25
    $region24: #{tpu_custom_call.1} parent=1 // pred_region
      %55 = dma.done [#allocation3], 2048
    $region25: #{tpu_custom_call.1} parent=1 // pred_fallthru
      _
    // Predicated region
    $region26: #{tpu_custom_call.1} parent=1 // pred_check
      _
    $region27: #{tpu_custom_call.1} parent=1 // pred_check_branch
      %57 = sbr.rel (0) target = $region29
    $region28: #{tpu_custom_call.1} parent=1 // pred_region
      %58 = dma.done [#allocation6], 1024
    $region29: #{tpu_custom_call.1} parent=1 // pred_fallthru
      _
    // Predicated region
    $region30: #{tpu_custom_call.1} parent=1 // pred_check
      _
    $region31: #{tpu_custom_call.1} parent=1 // pred_check_branch
      %60 = sbr.rel (0) target = $region33
    $region32: #{tpu_custom_call.1} parent=1 // pred_region
      %61 = dma.done [#allocation6], 1024
    $region33: #{tpu_custom_call.1} parent=1 // pred_fallthru
      _
    %v63 = vld [vmem:[#allocation2] sm:$0xff]
    %v64 = vld [vmem:[#allocation2 + $0x8] sm:$0xff]
    %v65 = vld [vmem:[#allocation2 + $0x10] sm:$0xff]
    %v66 = vld [vmem:[#allocation2 + $0x18] sm:$0xff]
    %v67 = vld [vmem:[#allocation2 + $0x20] sm:$0xff]
    %v68 = vld [vmem:[#allocation2 + $0x28] sm:$0xff]
    %v69 = vld [vmem:[#allocation2 + $0x30] sm:$0xff]
    %v70 = vld [vmem:[#allocation2 + $0x38] sm:$0xff]
    %v71 = vld [vmem:[#allocation2 + $0x40] sm:$0xff]
    %v72 = vld [vmem:[#allocation2 + $0x48] sm:$0xff]
    %v73 = vld [vmem:[#allocation2 + $0x50] sm:$0xff]
    %v74 = vld [vmem:[#allocation2 + $0x58] sm:$0xff]
    %v75 = vld [vmem:[#allocation2 + $0x60] sm:$0xff]
    %v76 = vld [vmem:[#allocation2 + $0x68] sm:$0xff]
    %v77 = vld [vmem:[#allocation2 + $0x70] sm:$0xff]
    %v78 = vld [vmem:[#allocation2 + $0x78] sm:$0xff]
    %v79 = vpack.c.bf16 %v64, %v63
    %v80 = vpack.c.bf16 %v66, %v65
    %v81 = vpack.c.bf16 %v68, %v67
    %v82 = vpack.c.bf16 %v70, %v69
    %v83 = vpack.c.bf16 %v72, %v71
    %v84 = vpack.c.bf16 %v74, %v73
    %v85 = vpack.c.bf16 %v76, %v75
    %v86 = vpack.c.bf16 %v78, %v77
    %v87 = vld [vmem:[#allocation5] sm:$0xf]
    %v88 = vld [vmem:[#allocation5 + $0x4] sm:$0xf]
    %v89 = vld [vmem:[#allocation5 + $0x8] sm:$0xf]
    %v90 = vld [vmem:[#allocation5 + $0xc] sm:$0xf]
    %v91 = vld [vmem:[#allocation5 + $0x10] sm:$0xf]
    %v92 = vld [vmem:[#allocation5 + $0x14] sm:$0xf]
    %v93 = vld [vmem:[#allocation5 + $0x18] sm:$0xf]
    %v94 = vld [vmem:[#allocation5 + $0x1c] sm:$0xf]
    %v95 = vld [vmem:[#allocation5 + $0x20] sm:$0xf]
    %v96 = vld [vmem:[#allocation5 + $0x24] sm:$0xf]
    %v97 = vld [vmem:[#allocation5 + $0x28] sm:$0xf]
    %v98 = vld [vmem:[#allocation5 + $0x2c] sm:$0xf]
    %v99 = vld [vmem:[#allocation5 + $0x30] sm:$0xf]
    %v100 = vld [vmem:[#allocation5 + $0x34] sm:$0xf]
    %v101 = vld [vmem:[#allocation5 + $0x38] sm:$0xf]
    %v102 = vld [vmem:[#allocation5 + $0x3c] sm:$0xf]
    %v103 = vld [vmem:[%s2] sm:$0x1]
    %v105 = vlaneseq
    %v106 = vshrl.u32 %v105, 7
    %v107 = vsub.s32 0, %v106
    %v108 = vrot.slane %v103, %v107
    %v126 = vunpack.c.l.b16 %v87
    %v127 = vunpack.c.l.b16 %v88
    %v128 = vunpack.c.l.b16 %v89
    %v129 = vunpack.c.l.b16 %v90
    %v130 = vunpack.c.l.b16 %v91
    %v131 = vunpack.c.l.b16 %v92
    %v132 = vunpack.c.l.b16 %v93
    %v133 = vunpack.c.l.b16 %v94
    %v134 = vunpack.c.l.b16 %v95
    %v135 = vunpack.c.l.b16 %v96
    %v136 = vunpack.c.l.b16 %v97
    %v137 = vunpack.c.l.b16 %v98
    %v138 = vunpack.c.l.b16 %v99
    %v139 = vunpack.c.l.b16 %v100
    %v140 = vunpack.c.l.b16 %v101
    %v141 = vunpack.c.l.b16 %v102
    %v142 = vpack.c.b16 %v127, %v126
    %v143 = vpack.c.b16 %v129, %v128
    %v144 = vpack.c.b16 %v131, %v130
    %v145 = vpack.c.b16 %v133, %v132
    %v146 = vpack.c.b16 %v135, %v134
    %v147 = vpack.c.b16 %v137, %v136
    %v148 = vpack.c.b16 %v139, %v138
    %v149 = vpack.c.b16 %v141, %v140
    %158 = vmatprep.subr.bf16.mxu0 0
    %159 = vmatpush1.bf16.msra.mxu0 %v149
    %160 = vmatprep.subr.bf16.mxu0 0
    %161 = vmatpush1.bf16.msra.mxu0 %v148
    %162 = vmatprep.subr.bf16.mxu0 0
    %163 = vmatpush1.bf16.msra.mxu0 %v147
    %164 = vmatprep.subr.bf16.mxu0 0
    %165 = vmatpush1.bf16.msra.mxu0 %v146
    %166 = vmatprep.subr.bf16.mxu0 0
    %167 = vmatpush1.bf16.msra.mxu0 %v145
    %168 = vmatprep.subr.bf16.mxu0 0
    %169 = vmatpush1.bf16.msra.mxu0 %v144
    %170 = vmatprep.subr.bf16.mxu0 0
    %171 = vmatpush1.bf16.msra.mxu0 %v143
    %172 = vmatprep.subr.bf16.mxu0 0
    %173 = vmatpush1.bf16.msra.mxu0 %v142
    %174 = vmatprep.subr.bf16.mxu0 0
    %175 = vmatpush2.bf16.msra.mxu0 0
    %176 = vmatprep.subr.bf16.mxu0 0
    %177 = vmatpush2.bf16.msra.mxu0 0
    %178 = vmatprep.subr.bf16.mxu0 0
    %179 = vmatpush2.bf16.msra.mxu0 0
    %180 = vmatprep.subr.bf16.mxu0 0
    %181 = vmatpush2.bf16.msra.mxu0 0
    %182 = vmatprep.subr.bf16.mxu0 0
    %183 = vmatpush2.bf16.msra.mxu0 0
    %184 = vmatprep.subr.bf16.mxu0 0
    %185 = vmatpush2.bf16.msra.mxu0 0
    %186 = vmatprep.subr.bf16.mxu0 0
    %187 = vmatpush2.bf16.msra.mxu0 0
    %188 = vmatprep.subr.bf16.mxu0 0
    %189 = vmatpush2.bf16.msra.mxu0 0
    %190 = vmatprep.mubr.bf16.mxu0 0
    %191 = vmatmul.mubr.bf16.gmra.mxu0 %v79
    %v192 = vpop.f32.mrf.mxu0
    %v193 = vadd.f32 %v108, %v192
    %v194 = vpop.f32.mrf.mxu0
    %v195 = vpop.f32.mrf.mxu0
    %v196 = vadd.f32 %v108, %v195
    %v197 = vpop.f32.mrf.mxu0
    %198 = vmatprep.mubr.bf16.mxu0 0
    %199 = vmatmul.mubr.bf16.gmra.mxu0 %v80
    %v200 = vpop.f32.mrf.mxu0
    %v201 = vadd.f32 %v108, %v200
    %v202 = vpop.f32.mrf.mxu0
    %v203 = vpop.f32.mrf.mxu0
    %v204 = vadd.f32 %v108, %v203
    %v205 = vpop.f32.mrf.mxu0
    %206 = vmatprep.mubr.bf16.mxu0 0
    %207 = vmatmul.mubr.bf16.gmra.mxu0 %v81
    %v208 = vpop.f32.mrf.mxu0
    %v209 = vadd.f32 %v108, %v208
    %v210 = vpop.f32.mrf.mxu0
    %v211 = vpop.f32.mrf.mxu0
    %v212 = vadd.f32 %v108, %v211
    %v213 = vpop.f32.mrf.mxu0
    %214 = vmatprep.mubr.bf16.mxu0 0
    %215 = vmatmul.mubr.bf16.gmra.mxu0 %v82
    %v216 = vpop.f32.mrf.mxu0
    %v217 = vadd.f32 %v108, %v216
    %v218 = vpop.f32.mrf.mxu0
    %v219 = vpop.f32.mrf.mxu0
    %v220 = vadd.f32 %v108, %v219
    %v221 = vpop.f32.mrf.mxu0
    %222 = vmatprep.mubr.bf16.mxu0 0
    %223 = vmatmul.mubr.bf16.gmra.mxu0 %v83
    %v224 = vpop.f32.mrf.mxu0
    %v225 = vadd.f32 %v108, %v224
    %v226 = vpop.f32.mrf.mxu0
    %v227 = vpop.f32.mrf.mxu0
    %v228 = vadd.f32 %v108, %v227
    %v229 = vpop.f32.mrf.mxu0
    %230 = vmatprep.mubr.bf16.mxu0 0
    %231 = vmatmul.mubr.bf16.gmra.mxu0 %v84
    %v232 = vpop.f32.mrf.mxu0
    %v233 = vadd.f32 %v108, %v232
    %v234 = vpop.f32.mrf.mxu0
    %v235 = vpop.f32.mrf.mxu0
    %v236 = vadd.f32 %v108, %v235
    %v237 = vpop.f32.mrf.mxu0
    %238 = vmatprep.mubr.bf16.mxu0 0
    %239 = vmatmul.mubr.bf16.gmra.mxu0 %v85
    %v240 = vpop.f32.mrf.mxu0
    %v241 = vadd.f32 %v108, %v240
    %v242 = vpop.f32.mrf.mxu0
    %v243 = vpop.f32.mrf.mxu0
    %v244 = vadd.f32 %v108, %v243
    %v245 = vpop.f32.mrf.mxu0
    %246 = vmatprep.mubr.bf16.mxu0 0
    %247 = vmatmul.mubr.bf16.gmra.mxu0 %v86
    %v248 = vpop.f32.mrf.mxu0
    %v249 = vadd.f32 %v108, %v248
    %v250 = vpop.f32.mrf.mxu0
    %v251 = vpop.f32.mrf.mxu0
    %v252 = vadd.f32 %v108, %v251
    %v253 = vpop.f32.mrf.mxu0
    %254 = vdwg.mxu0
    %v255 = vmax.f32 %v193, 0.0
    %v256 = vmax.f32 %v196, 0.0
    %v257 = vmax.f32 %v201, 0.0
    %v258 = vmax.f32 %v204, 0.0
    %v259 = vmax.f32 %v209, 0.0
    %v260 = vmax.f32 %v212, 0.0
    %v261 = vmax.f32 %v217, 0.0
    %v262 = vmax.f32 %v220, 0.0
    %v263 = vmax.f32 %v225, 0.0
    %v264 = vmax.f32 %v228, 0.0
    %v265 = vmax.f32 %v233, 0.0
    %v266 = vmax.f32 %v236, 0.0
    %v267 = vmax.f32 %v241, 0.0
    %v268 = vmax.f32 %v244, 0.0
    %v269 = vmax.f32 %v249, 0.0
    %v270 = vmax.f32 %v252, 0.0
    %v271 = vpack.c.bf16 %v256, %v255
    %v272 = vpack.c.bf16 %v258, %v257
    %v273 = vpack.c.bf16 %v260, %v259
    %v274 = vpack.c.bf16 %v262, %v261
    %v275 = vpack.c.bf16 %v264, %v263
    %v276 = vpack.c.bf16 %v266, %v265
    %v277 = vpack.c.bf16 %v268, %v267
    %v278 = vpack.c.bf16 %v270, %v269
    %v279 = vld [vmem:[#allocation7] sm:$0xf]
    %v280 = vld [vmem:[#allocation7 + $0x4] sm:$0xf]
    %v281 = vld [vmem:[#allocation7 + $0x8] sm:$0xf]
    %v282 = vld [vmem:[#allocation7 + $0xc] sm:$0xf]
    %v283 = vld [vmem:[#allocation7 + $0x10] sm:$0xf]
    %v284 = vld [vmem:[#allocation7 + $0x14] sm:$0xf]
    %v285 = vld [vmem:[#allocation7 + $0x18] sm:$0xf]
    %v286 = vld [vmem:[#allocation7 + $0x1c] sm:$0xf]
    %v287 = vld [vmem:[#allocation7 + $0x20] sm:$0xf]
    %v288 = vld [vmem:[#allocation7 + $0x24] sm:$0xf]
    %v289 = vld [vmem:[#allocation7 + $0x28] sm:$0xf]
    %v290 = vld [vmem:[#allocation7 + $0x2c] sm:$0xf]
    %v291 = vld [vmem:[#allocation7 + $0x30] sm:$0xf]
    %v292 = vld [vmem:[#allocation7 + $0x34] sm:$0xf]
    %v293 = vld [vmem:[#allocation7 + $0x38] sm:$0xf]
    %v294 = vld [vmem:[#allocation7 + $0x3c] sm:$0xf]
    %v295 = vld [vmem:[%s4] sm:$0x1]
    %v297 = vlaneseq
    %v298 = vshrl.u32 %v297, 7
    %v299 = vsub.s32 0, %v298
    %v300 = vrot.slane %v295, %v299
    %v318 = vunpack.c.l.b16 %v279
    %v319 = vunpack.c.l.b16 %v280
    %v320 = vunpack.c.l.b16 %v281
    %v321 = vunpack.c.l.b16 %v282
    %v322 = vunpack.c.l.b16 %v283
    %v323 = vunpack.c.l.b16 %v284
    %v324 = vunpack.c.l.b16 %v285
    %v325 = vunpack.c.l.b16 %v286
    %v326 = vunpack.c.l.b16 %v287
    %v327 = vunpack.c.l.b16 %v288
    %v328 = vunpack.c.l.b16 %v289
    %v329 = vunpack.c.l.b16 %v290
    %v330 = vunpack.c.l.b16 %v291
    %v331 = vunpack.c.l.b16 %v292
    %v332 = vunpack.c.l.b16 %v293
    %v333 = vunpack.c.l.b16 %v294
    %v334 = vpack.c.b16 %v319, %v318
    %v335 = vpack.c.b16 %v321, %v320
    %v336 = vpack.c.b16 %v323, %v322
    %v337 = vpack.c.b16 %v325, %v324
    %v338 = vpack.c.b16 %v327, %v326
    %v339 = vpack.c.b16 %v329, %v328
    %v340 = vpack.c.b16 %v331, %v330
    %v341 = vpack.c.b16 %v333, %v332
    %350 = vmatprep.subr.bf16.mxu0 0
    %351 = vmatpush1.bf16.msra.mxu0 %v341
    %352 = vmatprep.subr.bf16.mxu0 0
    %353 = vmatpush1.bf16.msra.mxu0 %v340
    %354 = vmatprep.subr.bf16.mxu0 0
    %355 = vmatpush1.bf16.msra.mxu0 %v339
    %356 = vmatprep.subr.bf16.mxu0 0
    %357 = vmatpush1.bf16.msra.mxu0 %v338
    %358 = vmatprep.subr.bf16.mxu0 0
    %359 = vmatpush1.bf16.msra.mxu0 %v337
    %360 = vmatprep.subr.bf16.mxu0 0
    %361 = vmatpush1.bf16.msra.mxu0 %v336
    %362 = vmatprep.subr.bf16.mxu0 0
    %363 = vmatpush1.bf16.msra.mxu0 %v335
    %364 = vmatprep.subr.bf16.mxu0 0
    %365 = vmatpush1.bf16.msra.mxu0 %v334
    %366 = vmatprep.subr.bf16.mxu0 0
    %367 = vmatpush2.bf16.msra.mxu0 0
    %368 = vmatprep.subr.bf16.mxu0 0
    %369 = vmatpush2.bf16.msra.mxu0 0
    %370 = vmatprep.subr.bf16.mxu0 0
    %371 = vmatpush2.bf16.msra.mxu0 0
    %372 = vmatprep.subr.bf16.mxu0 0
    %373 = vmatpush2.bf16.msra.mxu0 0
    %374 = vmatprep.subr.bf16.mxu0 0
    %375 = vmatpush2.bf16.msra.mxu0 0
    %376 = vmatprep.subr.bf16.mxu0 0
    %377 = vmatpush2.bf16.msra.mxu0 0
    %378 = vmatprep.subr.bf16.mxu0 0
    %379 = vmatpush2.bf16.msra.mxu0 0
    %380 = vmatprep.subr.bf16.mxu0 0
    %381 = vmatpush2.bf16.msra.mxu0 0
    %382 = vmatprep.mubr.bf16.mxu0 0
    %383 = vmatmul.mubr.bf16.gmra.mxu0 %v271
    %v384 = vpop.f32.mrf.mxu0
    %v385 = vadd.f32 %v300, %v384
    %v386 = vpop.f32.mrf.mxu0
    %v387 = vpop.f32.mrf.mxu0
    %v388 = vadd.f32 %v300, %v387
    %v389 = vpop.f32.mrf.mxu0
    %390 = vmatprep.mubr.bf16.mxu0 0
    %391 = vmatmul.mubr.bf16.gmra.mxu0 %v272
    %v392 = vpop.f32.mrf.mxu0
    %v393 = vadd.f32 %v300, %v392
    %v394 = vpop.f32.mrf.mxu0
    %v395 = vpop.f32.mrf.mxu0
    %v396 = vadd.f32 %v300, %v395
    %v397 = vpop.f32.mrf.mxu0
    %398 = vmatprep.mubr.bf16.mxu0 0
    %399 = vmatmul.mubr.bf16.gmra.mxu0 %v273
    %v400 = vpop.f32.mrf.mxu0
    %v401 = vadd.f32 %v300, %v400
    %v402 = vpop.f32.mrf.mxu0
    %v403 = vpop.f32.mrf.mxu0
    %v404 = vadd.f32 %v300, %v403
    %v405 = vpop.f32.mrf.mxu0
    %406 = vmatprep.mubr.bf16.mxu0 0
    %407 = vmatmul.mubr.bf16.gmra.mxu0 %v274
    %v408 = vpop.f32.mrf.mxu0
    %v409 = vadd.f32 %v300, %v408
    %v410 = vpop.f32.mrf.mxu0
    %v411 = vpop.f32.mrf.mxu0
    %v412 = vadd.f32 %v300, %v411
    %v413 = vpop.f32.mrf.mxu0
    %414 = vmatprep.mubr.bf16.mxu0 0
    %415 = vmatmul.mubr.bf16.gmra.mxu0 %v275
    %v416 = vpop.f32.mrf.mxu0
    %v417 = vadd.f32 %v300, %v416
    %v418 = vpop.f32.mrf.mxu0
    %v419 = vpop.f32.mrf.mxu0
    %v420 = vadd.f32 %v300, %v419
    %v421 = vpop.f32.mrf.mxu0
    %422 = vmatprep.mubr.bf16.mxu0 0
    %423 = vmatmul.mubr.bf16.gmra.mxu0 %v276
    %v424 = vpop.f32.mrf.mxu0
    %v425 = vadd.f32 %v300, %v424
    %v426 = vpop.f32.mrf.mxu0
    %v427 = vpop.f32.mrf.mxu0
    %v428 = vadd.f32 %v300, %v427
    %v429 = vpop.f32.mrf.mxu0
    %430 = vmatprep.mubr.bf16.mxu0 0
    %431 = vmatmul.mubr.bf16.gmra.mxu0 %v277
    %v432 = vpop.f32.mrf.mxu0
    %v433 = vadd.f32 %v300, %v432
    %v434 = vpop.f32.mrf.mxu0
    %v435 = vpop.f32.mrf.mxu0
    %v436 = vadd.f32 %v300, %v435
    %v437 = vpop.f32.mrf.mxu0
    %438 = vmatprep.mubr.bf16.mxu0 0
    %439 = vmatmul.mubr.bf16.gmra.mxu0 %v278
    %v440 = vpop.f32.mrf.mxu0
    %v441 = vadd.f32 %v300, %v440
    %v442 = vpop.f32.mrf.mxu0
    %v443 = vpop.f32.mrf.mxu0
    %v444 = vadd.f32 %v300, %v443
    %v445 = vpop.f32.mrf.mxu0
    %446 = vdwg.mxu0
    %447 = vst [vmem:[#allocation8] sm:$0xff] %v385
    %448 = vst [vmem:[#allocation8 + $0x8] sm:$0xff] %v388
    %449 = vst [vmem:[#allocation8 + $0x10] sm:$0xff] %v393
    %450 = vst [vmem:[#allocation8 + $0x18] sm:$0xff] %v396
    %451 = vst [vmem:[#allocation8 + $0x20] sm:$0xff] %v401
    %452 = vst [vmem:[#allocation8 + $0x28] sm:$0xff] %v404
    %453 = vst [vmem:[#allocation8 + $0x30] sm:$0xff] %v409
    %454 = vst [vmem:[#allocation8 + $0x38] sm:$0xff] %v412
    %455 = vst [vmem:[#allocation8 + $0x40] sm:$0xff] %v417
    %456 = vst [vmem:[#allocation8 + $0x48] sm:$0xff] %v420
    %457 = vst [vmem:[#allocation8 + $0x50] sm:$0xff] %v425
    %458 = vst [vmem:[#allocation8 + $0x58] sm:$0xff] %v428
    %459 = vst [vmem:[#allocation8 + $0x60] sm:$0xff] %v433
    %460 = vst [vmem:[#allocation8 + $0x68] sm:$0xff] %v436
    %461 = vst [vmem:[#allocation8 + $0x70] sm:$0xff] %v441
    %462 = vst [vmem:[#allocation8 + $0x78] sm:$0xff] %v444
    // Predicated region
    $region34: #{tpu_custom_call.1} parent=1 // pred_check
      _
    $region35: #{tpu_custom_call.1} parent=1 // pred_check_branch
      %464 = sbr.rel (0) target = $region37
    $region36: #{tpu_custom_call.1} parent=1 // pred_region
      %s466 = ssub.s32 2048, 2048
      %467 = vsyncadd [#allocation4], %s466
      %s468 = sshll.u32 [#allocation8], 4
      %s469 = int_to_ptr.vmem [resolvable:$true] %s468
      %474 = dma.vmem_to_hbm [thread:$0]  %s469, 2048, %s5, [#allocation4], 128, 128, 8
    $region37: #{tpu_custom_call.1} parent=1 // pred_fallthru
      _
    // Predicated region
    $region38: #{tpu_custom_call.1} parent=1 // pred_check
      _
    $region39: #{tpu_custom_call.1} parent=1 // pred_check_branch
      %476 = sbr.rel (0) target = $region41
    $region40: #{tpu_custom_call.1} parent=1 // pred_region
      %477 = dma.done [#allocation4], 2048
    $region41: #{tpu_custom_call.1} parent=1 // pred_fallthru
      _
    %478 = vsyncpa [#allocation3], 1
    %479 = vsyncpa [#allocation6], 1
    %480 = vsyncpa [#allocation4], 1

// kernel: tpu_custom_call.1
$region0: #{tpu_custom_call.1}
  #allocation0 [shape = 'u32[]', space=smem, size = 0x4, offset = 0x4, fixed_abs, tag = 'smem constant byte address 0x4 - core index']
  #allocation1 [shape = 'u32[144,128]{1,0:T(1,128)}', space=vmem, size = 0x12000, scoped, tag = 'internal scratch']
  %s0 = inlined_call_operand.hbm [shape: f32[128,128], index: 0, kind: input, shape index: {}]
  %s1 = inlined_call_operand.hbm [shape: bf16[128,128], index: 1, kind: input, shape index: {}]
  %s2 = inlined_call_operand.vmem [shape: f32[1,128], index: 2, kind: input, shape index: {}]
  %s3 = inlined_call_operand.hbm [shape: bf16[128,128], index: 3, kind: input, shape index: {}]
  %s4 = inlined_call_operand.vmem [shape: f32[1,128], index: 4, kind: input, shape index: {}]
  %s5 = inlined_call_operand.hbm [shape: f32[128,128], index: 5, kind: output, shape index: {}]
  %s6 = sld [smem:[#allocation0]]
  $region42: #{tpu_custom_call.1} parent=0
    _
  %s8 = ssub.s32 1, %s6
  %s9 = scalar_select 0, %s8, %s6
  $region1: #{tpu_custom_call.1} parent=0
    #allocation2 [shape = 'u8[65536]{0}', space=vmem, size = 0x10000, scoped, tag = 'input window, operand 0, single buffered']
    #allocation3 [shape = 's32[1]{0}', space=sflag, size = 0x4, scoped, tag = 'scoped memory for tpu_custom_call.1']
    #allocation4 [shape = 's32[1]{0}', space=sflag, size = 0x4, scoped, tag = 'scoped memory for tpu_custom_call.1']
    #allocation5 [shape = 'u8[32768]{0}', space=vmem, size = 0x8000, scoped, tag = 'input window, operand 1, single buffered']
    #allocation6 [shape = 's32[1]{0}', space=sflag, size = 0x4, scoped, tag = 'scoped memory for tpu_custom_call.1']
    #allocation7 [shape = 'u8[32768]{0}', space=vmem, size = 0x8000, scoped, tag = 'input window, operand 3, single buffered']
    #allocation8 [shape = 'u8[65536]{0}', space=vmem, size = 0x10000, scoped, tag = 'output window, operand 0, single buffered']
    %10 = vsyncpa [#allocation3], 0
    %11 = vsyncpa [#allocation6], 0
    %12 = vsyncpa [#allocation4], 0
    // Predicated region
    $region2: #{tpu_custom_call.1} parent=1 // pred_check
      _
    $region3: #{tpu_custom_call.1} parent=1 // pred_check_branch
      %14 = sbr.rel (0) target = $region5
    $region4: #{tpu_custom_call.1} parent=1 // pred_region
      %s16 = ssub.s32 2048, 2048
      %17 = vsyncadd [#allocation3], %s16
      %s18 = sshll.u32 [#allocation2], 4
      %s19 = int_to_ptr.vmem [resolvable:$true] %s18
      %24 = dma.hbm_to_vmem [thread:$0]  %s0, 2048, %s19, [#allocation3], 128, 128, 8
    $region5: #{tpu_custom_call.1} parent=1 // pred_fallthru
      _
    // Predicated region
    $region6: #{tpu_custom_call.1} parent=1 // pred_check
      _
    $region7: #{tpu_custom_call.1} parent=1 // pred_check_branch
      %26 = sbr.rel (0) target = $region9
    $region8: #{tpu_custom_call.1} parent=1 // pred_region
      %s28 = ssub.s32 1024, 1024
      %29 = vsyncadd [#allocation6], %s28
      %s30 = sshll.u32 [#allocation5], 4
      %s31 = int_to_ptr.vmem [resolvable:$true] %s30
      %36 = dma.hbm_to_vmem [thread:$0]  %s1, 1024, %s31, [#allocation6], 64, 64, 4
    $region9: #{tpu_custom_call.1} parent=1 // pred_fallthru
      _
    // Predicated region
    $region10: #{tpu_custom_call.1} parent=1 // pred_check
      _
    $region11: #{tpu_custom_call.1} parent=1 // pred_check_branch
      %38 = sbr.rel (0) target = $region13
    $region12: #{tpu_custom_call.1} parent=1 // pred_region
      _
    $region13: #{tpu_custom_call.1} parent=1 // pred_fallthru
      _
    // Predicated region
    $region14: #{tpu_custom_call.1} parent=1 // pred_check
      _
    $region15: #{tpu_custom_call.1} parent=1 // pred_check_branch
      %40 = sbr.rel (0) target = $region17
    $region16: #{tpu_custom_call.1} parent=1 // pred_region
      %s42 = ssub.s32 1024, 1024
      %43 = vsyncadd [#allocation6], %s42
      %s44 = sshll.u32 [#allocation7], 4
      %s45 = int_to_ptr.vmem [resolvable:$true] %s44
      %50 = dma.hbm_to_vmem [thread:$0]  %s3, 1024, %s45, [#allocation6], 64, 64, 4
    $region17: #{tpu_custom_call.1} parent=1 // pred_fallthru
      _
    // Predicated region
    $region18: #{tpu_custom_call.1} parent=1 // pred_check
      _
    $region19: #{tpu_custom_call.1} parent=1 // pred_check_branch
      %52 = sbr.rel (0) target = $region21
    $region20: #{tpu_custom_call.1} parent=1 // pred_region
      _
    $region21: #{tpu_custom_call.1} parent=1 // pred_fallthru
      _
    // Predicated region
    $region22: #{tpu_custom_call.1} parent=1 // pred_check
      _
    $region23: #{tpu_custom_call.1} parent=1 // pred_check_branch
      %54 = sbr.rel (0) target = $region25
    $region24: #{tpu_custom_call.1} parent=1 // pred_region
      %55 = dma.done [#allocation3], 2048
    $region25: #{tpu_custom_call.1} parent=1 // pred_fallthru
      _
    // Predicated region
    $region26: #{tpu_custom_call.1} parent=1 // pred_check
      _
    $region27: #{tpu_custom_call.1} parent=1 // pred_check_branch
      %57 = sbr.rel (0) target = $region29
    $region28: #{tpu_custom_call.1} parent=1 // pred_region
      %58 = dma.done [#allocation6], 1024
    $region29: #{tpu_custom_call.1} parent=1 // pred_fallthru
      _
    // Predicated region
    $region30: #{tpu_custom_call.1} parent=1 // pred_check
      _
    $region31: #{tpu_custom_call.1} parent=1 // pred_check_branch
      %60 = sbr.rel (0) target = $region33
    $region32: #{tpu_custom_call.1} parent=1 // pred_region
      %61 = dma.done [#allocation6], 1024
    $region33: #{tpu_custom_call.1} parent=1 // pred_fallthru
      _
    %v63 = vld [vmem:[#allocation2] sm:$0xff]
    %v64 = vld [vmem:[#allocation2 + $0x8] sm:$0xff]
    %v65 = vld [vmem:[#allocation2 + $0x10] sm:$0xff]
    %v66 = vld [vmem:[#allocation2 + $0x18] sm:$0xff]
    %v67 = vld [vmem:[#allocation2 + $0x20] sm:$0xff]
    %v68 = vld [vmem:[#allocation2 + $0x28] sm:$0xff]
    %v69 = vld [vmem:[#allocation2 + $0x30] sm:$0xff]
    %v70 = vld [vmem:[#allocation2 + $0x38] sm:$0xff]
    %v71 = vld [vmem:[#allocation2 + $0x40] sm:$0xff]
    %v72 = vld [vmem:[#allocation2 + $0x48] sm:$0xff]
    %v73 = vld [vmem:[#allocation2 + $0x50] sm:$0xff]
    %v74 = vld [vmem:[#allocation2 + $0x58] sm:$0xff]
    %v75 = vld [vmem:[#allocation2 + $0x60] sm:$0xff]
    %v76 = vld [vmem:[#allocation2 + $0x68] sm:$0xff]
    %v77 = vld [vmem:[#allocation2 + $0x70] sm:$0xff]
    %v78 = vld [vmem:[#allocation2 + $0x78] sm:$0xff]
    %v79 = vpack.c.bf16 %v64, %v63
    %v80 = vpack.c.bf16 %v66, %v65
    %v81 = vpack.c.bf16 %v68, %v67
    %v82 = vpack.c.bf16 %v70, %v69
    %v83 = vpack.c.bf16 %v72, %v71
    %v84 = vpack.c.bf16 %v74, %v73
    %v85 = vpack.c.bf16 %v76, %v75
    %v86 = vpack.c.bf16 %v78, %v77
    %v87 = vld [vmem:[#allocation5] sm:$0xf]
    %v88 = vld [vmem:[#allocation5 + $0x4] sm:$0xf]
    %v89 = vld [vmem:[#allocation5 + $0x8] sm:$0xf]
    %v90 = vld [vmem:[#allocation5 + $0xc] sm:$0xf]
    %v91 = vld [vmem:[#allocation5 + $0x10] sm:$0xf]
    %v92 = vld [vmem:[#allocation5 + $0x14] sm:$0xf]
    %v93 = vld [vmem:[#allocation5 + $0x18] sm:$0xf]
    %v94 = vld [vmem:[#allocation5 + $0x1c] sm:$0xf]
    %v95 = vld [vmem:[#allocation5 + $0x20] sm:$0xf]
    %v96 = vld [vmem:[#allocation5 + $0x24] sm:$0xf]
    %v97 = vld [vmem:[#allocation5 + $0x28] sm:$0xf]
    %v98 = vld [vmem:[#allocation5 + $0x2c] sm:$0xf]
    %v99 = vld [vmem:[#allocation5 + $0x30] sm:$0xf]
    %v100 = vld [vmem:[#allocation5 + $0x34] sm:$0xf]
    %v101 = vld [vmem:[#allocation5 + $0x38] sm:$0xf]
    %v102 = vld [vmem:[#allocation5 + $0x3c] sm:$0xf]
    %v103 = vld [vmem:[%s2] sm:$0x1]
    %v105 = vlaneseq
    %v106 = vshrl.u32 %v105, 7
    %v107 = vsub.s32 0, %v106
    %v108 = vrot.slane %v103, %v107
    %v126 = vunpack.c.l.b16 %v87
    %v127 = vunpack.c.l.b16 %v88
    %v128 = vunpack.c.l.b16 %v89
    %v129 = vunpack.c.l.b16 %v90
    %v130 = vunpack.c.l.b16 %v91
    %v131 = vunpack.c.l.b16 %v92
    %v132 = vunpack.c.l.b16 %v93
    %v133 = vunpack.c.l.b16 %v94
    %v134 = vunpack.c.l.b16 %v95
    %v135 = vunpack.c.l.b16 %v96
    %v136 = vunpack.c.l.b16 %v97
    %v137 = vunpack.c.l.b16 %v98
    %v138 = vunpack.c.l.b16 %v99
    %v139 = vunpack.c.l.b16 %v100
    %v140 = vunpack.c.l.b16 %v101
    %v141 = vunpack.c.l.b16 %v102
    %v142 = vpack.c.b16 %v127, %v126
    %v143 = vpack.c.b16 %v129, %v128
    %v144 = vpack.c.b16 %v131, %v130
    %v145 = vpack.c.b16 %v133, %v132
    %v146 = vpack.c.b16 %v135, %v134
    %v147 = vpack.c.b16 %v137, %v136
    %v148 = vpack.c.b16 %v139, %v138
    %v149 = vpack.c.b16 %v141, %v140
    %158 = vmatprep.subr.bf16.mxu0 0
    %159 = vmatpush1.bf16.msra.mxu0 %v149
    %160 = vmatprep.subr.bf16.mxu0 0
    %161 = vmatpush1.bf16.msra.mxu0 %v148
    %162 = vmatprep.subr.bf16.mxu0 0
    %163 = vmatpush1.bf16.msra.mxu0 %v147
    %164 = vmatprep.subr.bf16.mxu0 0
    %165 = vmatpush1.bf16.msra.mxu0 %v146
    %166 = vmatprep.subr.bf16.mxu0 0
    %167 = vmatpush1.bf16.msra.mxu0 %v145
    %168 = vmatprep.subr.bf16.mxu0 0
    %169 = vmatpush1.bf16.msra.mxu0 %v144
    %170 = vmatprep.subr.bf16.mxu0 0
    %171 = vmatpush1.bf16.msra.mxu0 %v143
    %172 = vmatprep.subr.bf16.mxu0 0
    %173 = vmatpush1.bf16.msra.mxu0 %v142
    %174 = vmatprep.subr.bf16.mxu0 0
    %175 = vmatpush2.bf16.msra.mxu0 0
    %176 = vmatprep.subr.bf16.mxu0 0
    %177 = vmatpush2.bf16.msra.mxu0 0
    %178 = vmatprep.subr.bf16.mxu0 0
    %179 = vmatpush2.bf16.msra.mxu0 0
    %180 = vmatprep.subr.bf16.mxu0 0
    %181 = vmatpush2.bf16.msra.mxu0 0
    %182 = vmatprep.subr.bf16.mxu0 0
    %183 = vmatpush2.bf16.msra.mxu0 0
    %184 = vmatprep.subr.bf16.mxu0 0
    %185 = vmatpush2.bf16.msra.mxu0 0
    %186 = vmatprep.subr.bf16.mxu0 0
    %187 = vmatpush2.bf16.msra.mxu0 0
    %188 = vmatprep.subr.bf16.mxu0 0
    %189 = vmatpush2.bf16.msra.mxu0 0
    %190 = vmatprep.mubr.bf16.mxu0 0
    %191 = vmatmul.mubr.bf16.gmra.mxu0 %v79
    %v192 = vpop.f32.mrf.mxu0
    %v193 = vadd.f32 %v108, %v192
    %v194 = vpop.f32.mrf.mxu0
    %v195 = vpop.f32.mrf.mxu0
    %v196 = vadd.f32 %v108, %v195
    %v197 = vpop.f32.mrf.mxu0
    %198 = vmatprep.mubr.bf16.mxu0 0
    %199 = vmatmul.mubr.bf16.gmra.mxu0 %v80
    %v200 = vpop.f32.mrf.mxu0
    %v201 = vadd.f32 %v108, %v200
    %v202 = vpop.f32.mrf.mxu0
    %v203 = vpop.f32.mrf.mxu0
    %v204 = vadd.f32 %v108, %v203
    %v205 = vpop.f32.mrf.mxu0
    %206 = vmatprep.mubr.bf16.mxu0 0
    %207 = vmatmul.mubr.bf16.gmra.mxu0 %v81
    %v208 = vpop.f32.mrf.mxu0
    %v209 = vadd.f32 %v108, %v208
    %v210 = vpop.f32.mrf.mxu0
    %v211 = vpop.f32.mrf.mxu0
    %v212 = vadd.f32 %v108, %v211
    %v213 = vpop.f32.mrf.mxu0
    %214 = vmatprep.mubr.bf16.mxu0 0
    %215 = vmatmul.mubr.bf16.gmra.mxu0 %v82
    %v216 = vpop.f32.mrf.mxu0
    %v217 = vadd.f32 %v108, %v216
    %v218 = vpop.f32.mrf.mxu0
    %v219 = vpop.f32.mrf.mxu0
    %v220 = vadd.f32 %v108, %v219
    %v221 = vpop.f32.mrf.mxu0
    %222 = vmatprep.mubr.bf16.mxu0 0
    %223 = vmatmul.mubr.bf16.gmra.mxu0 %v83
    %v224 = vpop.f32.mrf.mxu0
    %v225 = vadd.f32 %v108, %v224
    %v226 = vpop.f32.mrf.mxu0
    %v227 = vpop.f32.mrf.mxu0
    %v228 = vadd.f32 %v108, %v227
    %v229 = vpop.f32.mrf.mxu0
    %230 = vmatprep.mubr.bf16.mxu0 0
    %231 = vmatmul.mubr.bf16.gmra.mxu0 %v84
    %v232 = vpop.f32.mrf.mxu0
    %v233 = vadd.f32 %v108, %v232
    %v234 = vpop.f32.mrf.mxu0
    %v235 = vpop.f32.mrf.mxu0
    %v236 = vadd.f32 %v108, %v235
    %v237 = vpop.f32.mrf.mxu0
    %238 = vmatprep.mubr.bf16.mxu0 0
    %239 = vmatmul.mubr.bf16.gmra.mxu0 %v85
    %v240 = vpop.f32.mrf.mxu0
    %v241 = vadd.f32 %v108, %v240
    %v242 = vpop.f32.mrf.mxu0
    %v243 = vpop.f32.mrf.mxu0
    %v244 = vadd.f32 %v108, %v243
    %v245 = vpop.f32.mrf.mxu0
    %246 = vmatprep.mubr.bf16.mxu0 0
    %247 = vmatmul.mubr.bf16.gmra.mxu0 %v86
    %v248 = vpop.f32.mrf.mxu0
    %v249 = vadd.f32 %v108, %v248
    %v250 = vpop.f32.mrf.mxu0
    %v251 = vpop.f32.mrf.mxu0
    %v252 = vadd.f32 %v108, %v251
    %v253 = vpop.f32.mrf.mxu0
    %254 = vdwg.mxu0
    %v255 = vmax.f32 %v193, 0.0
    %v256 = vmax.f32 %v196, 0.0
    %v257 = vmax.f32 %v201, 0.0
    %v258 = vmax.f32 %v204, 0.0
    %v259 = vmax.f32 %v209, 0.0
    %v260 = vmax.f32 %v212, 0.0
    %v261 = vmax.f32 %v217, 0.0
    %v262 = vmax.f32 %v220, 0.0
    %v263 = vmax.f32 %v225, 0.0
    %v264 = vmax.f32 %v228, 0.0
    %v265 = vmax.f32 %v233, 0.0
    %v266 = vmax.f32 %v236, 0.0
    %v267 = vmax.f32 %v241, 0.0
    %v268 = vmax.f32 %v244, 0.0
    %v269 = vmax.f32 %v249, 0.0
    %v270 = vmax.f32 %v252, 0.0
    %v271 = vpack.c.bf16 %v256, %v255
    %v272 = vpack.c.bf16 %v258, %v257
    %v273 = vpack.c.bf16 %v260, %v259
    %v274 = vpack.c.bf16 %v262, %v261
    %v275 = vpack.c.bf16 %v264, %v263
    %v276 = vpack.c.bf16 %v266, %v265
    %v277 = vpack.c.bf16 %v268, %v267
    %v278 = vpack.c.bf16 %v270, %v269
    %v279 = vld [vmem:[#allocation7] sm:$0xf]
    %v280 = vld [vmem:[#allocation7 + $0x4] sm:$0xf]
    %v281 = vld [vmem:[#allocation7 + $0x8] sm:$0xf]
    %v282 = vld [vmem:[#allocation7 + $0xc] sm:$0xf]
    %v283 = vld [vmem:[#allocation7 + $0x10] sm:$0xf]
    %v284 = vld [vmem:[#allocation7 + $0x14] sm:$0xf]
    %v285 = vld [vmem:[#allocation7 + $0x18] sm:$0xf]
    %v286 = vld [vmem:[#allocation7 + $0x1c] sm:$0xf]
    %v287 = vld [vmem:[#allocation7 + $0x20] sm:$0xf]
    %v288 = vld [vmem:[#allocation7 + $0x24] sm:$0xf]
    %v289 = vld [vmem:[#allocation7 + $0x28] sm:$0xf]
    %v290 = vld [vmem:[#allocation7 + $0x2c] sm:$0xf]
    %v291 = vld [vmem:[#allocation7 + $0x30] sm:$0xf]
    %v292 = vld [vmem:[#allocation7 + $0x34] sm:$0xf]
    %v293 = vld [vmem:[#allocation7 + $0x38] sm:$0xf]
    %v294 = vld [vmem:[#allocation7 + $0x3c] sm:$0xf]
    %v295 = vld [vmem:[%s4] sm:$0x1]
    %v297 = vlaneseq
    %v298 = vshrl.u32 %v297, 7
    %v299 = vsub.s32 0, %v298
    %v300 = vrot.slane %v295, %v299
    %v318 = vunpack.c.l.b16 %v279
    %v319 = vunpack.c.l.b16 %v280
    %v320 = vunpack.c.l.b16 %v281
    %v321 = vunpack.c.l.b16 %v282
    %v322 = vunpack.c.l.b16 %v283
    %v323 = vunpack.c.l.b16 %v284
    %v324 = vunpack.c.l.b16 %v285
    %v325 = vunpack.c.l.b16 %v286
    %v326 = vunpack.c.l.b16 %v287
    %v327 = vunpack.c.l.b16 %v288
    %v328 = vunpack.c.l.b16 %v289
    %v329 = vunpack.c.l.b16 %v290
    %v330 = vunpack.c.l.b16 %v291
    %v331 = vunpack.c.l.b16 %v292
    %v332 = vunpack.c.l.b16 %v293
    %v333 = vunpack.c.l.b16 %v294
    %v334 = vpack.c.b16 %v319, %v318
    %v335 = vpack.c.b16 %v321, %v320
    %v336 = vpack.c.b16 %v323, %v322
    %v337 = vpack.c.b16 %v325, %v324
    %v338 = vpack.c.b16 %v327, %v326
    %v339 = vpack.c.b16 %v329, %v328
    %v340 = vpack.c.b16 %v331, %v330
    %v341 = vpack.c.b16 %v333, %v332
    %350 = vmatprep.subr.bf16.mxu0 0
    %351 = vmatpush1.bf16.msra.mxu0 %v341
    %352 = vmatprep.subr.bf16.mxu0 0
    %353 = vmatpush1.bf16.msra.mxu0 %v340
    %354 = vmatprep.subr.bf16.mxu0 0
    %355 = vmatpush1.bf16.msra.mxu0 %v339
    %356 = vmatprep.subr.bf16.mxu0 0
    %357 = vmatpush1.bf16.msra.mxu0 %v338
    %358 = vmatprep.subr.bf16.mxu0 0
    %359 = vmatpush1.bf16.msra.mxu0 %v337
    %360 = vmatprep.subr.bf16.mxu0 0
    %361 = vmatpush1.bf16.msra.mxu0 %v336
    %362 = vmatprep.subr.bf16.mxu0 0
    %363 = vmatpush1.bf16.msra.mxu0 %v335
    %364 = vmatprep.subr.bf16.mxu0 0
    %365 = vmatpush1.bf16.msra.mxu0 %v334
    %366 = vmatprep.subr.bf16.mxu0 0
    %367 = vmatpush2.bf16.msra.mxu0 0
    %368 = vmatprep.subr.bf16.mxu0 0
    %369 = vmatpush2.bf16.msra.mxu0 0
    %370 = vmatprep.subr.bf16.mxu0 0
    %371 = vmatpush2.bf16.msra.mxu0 0
    %372 = vmatprep.subr.bf16.mxu0 0
    %373 = vmatpush2.bf16.msra.mxu0 0
    %374 = vmatprep.subr.bf16.mxu0 0
    %375 = vmatpush2.bf16.msra.mxu0 0
    %376 = vmatprep.subr.bf16.mxu0 0
    %377 = vmatpush2.bf16.msra.mxu0 0
    %378 = vmatprep.subr.bf16.mxu0 0
    %379 = vmatpush2.bf16.msra.mxu0 0
    %380 = vmatprep.subr.bf16.mxu0 0
    %381 = vmatpush2.bf16.msra.mxu0 0
    %382 = vmatprep.mubr.bf16.mxu0 0
    %383 = vmatmul.mubr.bf16.gmra.mxu0 %v271
    %v384 = vpop.f32.mrf.mxu0
    %v385 = vadd.f32 %v300, %v384
    %v386 = vpop.f32.mrf.mxu0
    %v387 = vpop.f32.mrf.mxu0
    %v388 = vadd.f32 %v300, %v387
    %v389 = vpop.f32.mrf.mxu0
    %390 = vmatprep.mubr.bf16.mxu0 0
    %391 = vmatmul.mubr.bf16.gmra.mxu0 %v272
    %v392 = vpop.f32.mrf.mxu0
    %v393 = vadd.f32 %v300, %v392
    %v394 = vpop.f32.mrf.mxu0
    %v395 = vpop.f32.mrf.mxu0
    %v396 = vadd.f32 %v300, %v395
    %v397 = vpop.f32.mrf.mxu0
    %398 = vmatprep.mubr.bf16.mxu0 0
    %399 = vmatmul.mubr.bf16.gmra.mxu0 %v273
    %v400 = vpop.f32.mrf.mxu0
    %v401 = vadd.f32 %v300, %v400
    %v402 = vpop.f32.mrf.mxu0
    %v403 = vpop.f32.mrf.mxu0
    %v404 = vadd.f32 %v300, %v403
    %v405 = vpop.f32.mrf.mxu0
    %406 = vmatprep.mubr.bf16.mxu0 0
    %407 = vmatmul.mubr.bf16.gmra.mxu0 %v274
    %v408 = vpop.f32.mrf.mxu0
    %v409 = vadd.f32 %v300, %v408
    %v410 = vpop.f32.mrf.mxu0
    %v411 = vpop.f32.mrf.mxu0
    %v412 = vadd.f32 %v300, %v411
    %v413 = vpop.f32.mrf.mxu0
    %414 = vmatprep.mubr.bf16.mxu0 0
    %415 = vmatmul.mubr.bf16.gmra.mxu0 %v275
    %v416 = vpop.f32.mrf.mxu0
    %v417 = vadd.f32 %v300, %v416
    %v418 = vpop.f32.mrf.mxu0
    %v419 = vpop.f32.mrf.mxu0
    %v420 = vadd.f32 %v300, %v419
    %v421 = vpop.f32.mrf.mxu0
    %422 = vmatprep.mubr.bf16.mxu0 0
    %423 = vmatmul.mubr.bf16.gmra.mxu0 %v276
    %v424 = vpop.f32.mrf.mxu0
    %v425 = vadd.f32 %v300, %v424
    %v426 = vpop.f32.mrf.mxu0
    %v427 = vpop.f32.mrf.mxu0
    %v428 = vadd.f32 %v300, %v427
    %v429 = vpop.f32.mrf.mxu0
    %430 = vmatprep.mubr.bf16.mxu0 0
    %431 = vmatmul.mubr.bf16.gmra.mxu0 %v277
    %v432 = vpop.f32.mrf.mxu0
    %v433 = vadd.f32 %v300, %v432
    %v434 = vpop.f32.mrf.mxu0
    %v435 = vpop.f32.mrf.mxu0
    %v436 = vadd.f32 %v300, %v435
    %v437 = vpop.f32.mrf.mxu0
    %438 = vmatprep.mubr.bf16.mxu0 0
    %439 = vmatmul.mubr.bf16.gmra.mxu0 %v278
    %v440 = vpop.f32.mrf.mxu0
    %v441 = vadd.f32 %v300, %v440
    %v442 = vpop.f32.mrf.mxu0
    %v443 = vpop.f32.mrf.mxu0
    %v444 = vadd.f32 %v300, %v443
    %v445 = vpop.f32.mrf.mxu0
    %446 = vdwg.mxu0
    %447 = vst [vmem:[#allocation8] sm:$0xff] %v385
    %448 = vst [vmem:[#allocation8 + $0x8] sm:$0xff] %v388
    %449 = vst [vmem:[#allocation8 + $0x10] sm:$0xff] %v393
    %450 = vst [vmem:[#allocation8 + $0x18] sm:$0xff] %v396
    %451 = vst [vmem:[#allocation8 + $0x20] sm:$0xff] %v401
    %452 = vst [vmem:[#allocation8 + $0x28] sm:$0xff] %v404
    %453 = vst [vmem:[#allocation8 + $0x30] sm:$0xff] %v409
    %454 = vst [vmem:[#allocation8 + $0x38] sm:$0xff] %v412
    %455 = vst [vmem:[#allocation8 + $0x40] sm:$0xff] %v417
    %456 = vst [vmem:[#allocation8 + $0x48] sm:$0xff] %v420
    %457 = vst [vmem:[#allocation8 + $0x50] sm:$0xff] %v425
    %458 = vst [vmem:[#allocation8 + $0x58] sm:$0xff] %v428
    %459 = vst [vmem:[#allocation8 + $0x60] sm:$0xff] %v433
    %460 = vst [vmem:[#allocation8 + $0x68] sm:$0xff] %v436
    %461 = vst [vmem:[#allocation8 + $0x70] sm:$0xff] %v441
    %462 = vst [vmem:[#allocation8 + $0x78] sm:$0xff] %v444
    // Predicated region
    $region34: #{tpu_custom_call.1} parent=1 // pred_check
      _
    $region35: #{tpu_custom_call.1} parent=1 // pred_check_branch
      %464 = sbr.rel (0) target = $region37
    $region36: #{tpu_custom_call.1} parent=1 // pred_region
      %s466 = ssub.s32 2048, 2048
      %467 = vsyncadd [#allocation4], %s466
      %s468 = sshll.u32 [#allocation8], 4
      %s469 = int_to_ptr.vmem [resolvable:$true] %s468
      %474 = dma.vmem_to_hbm [thread:$0]  %s469, 2048, %s5, [#allocation4], 128, 128, 8
    $region37: #{tpu_custom_call.1} parent=1 // pred_fallthru
      _
    // Predicated region
    $region38: #{tpu_custom_call.1} parent=1 // pred_check
      _
    $region39: #{tpu_custom_call.1} parent=1 // pred_check_branch
      %476 = sbr.rel (0) target = $region41
    $region40: #{tpu_custom_call.1} parent=1 // pred_region
      %477 = dma.done [#allocation4], 2048
    $region41: #{tpu_custom_call.1} parent=1 // pred_fallthru
      _
    %478 = vsyncpa [#allocation3], 1
    %479 = vsyncpa [#allocation6], 1
    %480 = vsyncpa [#allocation4], 1

</llo_original>
